<compile_context>
chip_gen: v6e
topology: v6e:2x2x1
jax: 0.10.0
libtpu: 0.0.40
codegen_flags: <defaults>
</compile_context>

<pallas_src>
from typing import NamedTuple

import jax
import jax.numpy as jnp
from jax.experimental import pallas as pl
from jax.experimental.pallas import tpu as pltpu


class Graph(NamedTuple):
    node_features: jax.Array  # [B, N, F]
    mask: jax.Array           # [B, N] bool


def _masked_sumsq_kernel(true_ref, pred_ref, mask_ref, out_ref):
    s = pl.program_id(1)  # reduction step within this parallel slice

    @pl.when(s == 0)
    def _():
        out_ref[...] = jnp.zeros_like(out_ref)

    t = true_ref[...].astype(jnp.float32)   # (T, F)
    p = pred_ref[...].astype(jnp.float32)   # (T, F)
    m = mask_ref[...]                       # (T, 1) f32 {0,1}; zero in padded rows

    # Select (not multiply): rows past the true array end read garbage VMEM in
    # the partial final data tile; their mask is 0, and select never lets a
    # NaN/Inf from the unselected branch through.
    d = jnp.where(m > 0.0, p - t, 0.0)      # (T, F)
    dd = d * d

    tile_rows, feat = dd.shape
    # Fold only the tile-row axis (groups of 8 sublanes) -> pure VPU adds,
    # keeping an (8, F) vector partial resident in the output block.
    partial = jnp.sum(dd.reshape(tile_rows // 8, 8, feat), axis=0)  # (8, F)
    out_ref[...] += partial[None]           # out_ref block is (1, 8, F)


def _pick_tile_rows(rows, feat, vmem_budget_bytes=12 * 1024 * 1024):
    """Largest multiple-of-8 row tile whose double-buffered input blocks plus
    ~2 tile-sized f32 temporaries fit the VMEM budget (safe on v5e/v6e/v7x)."""
    lanes = 128
    f_pad = pl.cdiv(feat, lanes) * lanes          # lane padding of the F axis in VMEM
    per_row = 4 * (2 * 2 * f_pad                  # true + pred blocks, double-buffered
                   + 2 * lanes                    # mask column block, double-buffered
                   + 2 * f_pad)                   # elementwise temporaries
    tile = max(8, (vmem_budget_bytes // per_row) // 8 * 8)
    return int(min(tile, pl.cdiv(rows, 8) * 8))


@jax.jit
def masked_node_mse(nodes_true, nodes_pred, mask):
    B, N, F = nodes_true.shape
    rows = B * N

    t = nodes_true.reshape(rows, F)               # free reshapes, no data padding copies
    p = nodes_pred.reshape(rows, F)

    tile_rows = _pick_tile_rows(rows, F)
    total_tiles = pl.cdiv(rows, tile_rows)
    n_parallel = min(8, total_tiles)              # outer "parallel" partials
    inner_steps = pl.cdiv(total_tiles, n_parallel)
    padded_rows = n_parallel * inner_steps * tile_rows

    # Zero-padded mask column covering every grid step (including overshoot
    # steps whose data DMA is clamped to the last tile). Only rows*4 bytes of
    # extra traffic; removes all per-row validity math from the kernel.
    m = jnp.zeros((padded_rows, 1), jnp.float32).at[:rows, 0].set(
        mask.reshape(rows).astype(jnp.float32))

    def data_map(pi, si):
        # Clamp so a DMA never starts past the end of the data; overshoot
        # steps re-read the last tile but see an all-zero mask tile.
        return (jnp.minimum(pi * inner_steps + si, total_tiles - 1), 0)

    def mask_map(pi, si):
        return (pi * inner_steps + si, 0)         # always in bounds of padded mask

    partials = pl.pallas_call(
        _masked_sumsq_kernel,
        out_shape=jax.ShapeDtypeStruct((n_parallel, 8, F), jnp.float32),
        grid=(n_parallel, inner_steps),
        in_specs=[
            pl.BlockSpec((tile_rows, F), data_map),
            pl.BlockSpec((tile_rows, F), data_map),
            pl.BlockSpec((tile_rows, 1), mask_map),
        ],
        out_specs=pl.BlockSpec((1, 8, F), lambda pi, si: (pi, 0, 0)),
        compiler_params=pltpu.CompilerParams(
            dimension_semantics=("parallel", "arbitrary"),
            vmem_limit_bytes=32 * 1024 * 1024),
        cost_estimate=pl.CostEstimate(
            flops=3 * rows * F,
            transcendentals=0,
            bytes_accessed=2 * rows * F * 4 + padded_rows * 4
                           + n_parallel * 8 * F * 4),
    )(t, p, m)

    sumsq = jnp.sum(partials)                     # tiny (P, 8, F) final reduce
    count = jnp.sum(m)                            # number of selected rows (padding is 0)
    # count == 0 -> NaN, matching torch MSELoss(mean) over an empty selection.
    return sumsq / (count * jnp.float32(F))


def graph_reconstruction_loss(graph_true: Graph, graph_pred: Graph):
    node_loss = masked_node_mse(
        graph_true.node_features, graph_pred.node_features, graph_true.mask)
    return {"node_loss": node_loss, "loss": node_loss}


if __name__ == "__main__":
    key = jax.random.PRNGKey(0)
    k1, k2, k3 = jax.random.split(key, 3)

    B, N, F = 2, 16, 32
    nodes_true = jax.random.normal(k1, (B, N, F), dtype=jnp.float32)
    nodes_pred = jax.random.normal(k2, (B, N, F), dtype=jnp.float32)
    mask = jax.random.bernoulli(k3, p=0.7, shape=(B, N))

    graph_true = Graph(node_features=nodes_true, mask=mask)
    graph_pred = Graph(node_features=nodes_pred, mask=mask)

    out = graph_reconstruction_loss(graph_true, graph_pred)
    loss = jax.block_until_ready(out["loss"])

    # Pure-JAX reference (same semantics as torch MSELoss(mean) on masked rows).
    mf = mask.reshape(-1).astype(jnp.float32)
    d = (nodes_pred - nodes_true).reshape(-1, F)
    ref = jnp.sum(d * d * mf[:, None]) / (jnp.sum(mf) * F)
    assert jnp.allclose(loss, ref, rtol=1e-5, atol=1e-6), (loss, ref)

    print("KERNEL_OK")
</pallas_src>

<mosaic_0001>
module attributes {stable_mosaic.version = 11 : i64} {
  func.func @_masked_sumsq_kernel(%arg0: i32, %arg1: i32, %arg2: memref<32x32xf32, #tpu.memory_space<vmem>>, %arg3: memref<32x32xf32, #tpu.memory_space<vmem>>, %arg4: memref<32x1xf32, #tpu.memory_space<vmem>>, %arg5: memref<1x8x32xf32, #tpu.memory_space<vmem>>) attributes {dimension_semantics = [#tpu.dimension_semantics<parallel>, #tpu.dimension_semantics<arbitrary>], iteration_bounds = array<i64: 1, 1>, scalar_prefetch = 0 : i64, scratch_operands = 0 : i64, tpu.core_type = #tpu.core_type<tc>, window_params = [{transform_indices = @transform_0, window_bounds = array<i64: 32, 32>}, {transform_indices = @transform_1, window_bounds = array<i64: 32, 32>}, {transform_indices = @transform_2, window_bounds = array<i64: 32, 1>}, {transform_indices = @transform_3, window_bounds = array<i64: 1, 8, 32>}]} {
    %c0_i32 = arith.constant 0 : i32
    %0 = arith.cmpi eq, %arg1, %c0_i32 : i32
    %1 = arith.extui %0 : i1 to i32
    %c0_i32_0 = arith.constant 0 : i32
    %2 = arith.cmpi ne, %1, %c0_i32_0 : i32
    scf.if %2 {
      %cst_14 = arith.constant 0.000000e+00 : f32
      %20 = vector.broadcast %cst_14 : f32 to vector<1x8x32xf32>
      %c0_15 = arith.constant 0 : index
      %c0_16 = arith.constant 0 : index
      %c0_17 = arith.constant 0 : index
      %21 = vector.load %arg5[%c0_15, %c0_16, %c0_17] : memref<1x8x32xf32, #tpu.memory_space<vmem>>, vector<1x8x32xf32>
      tpu.vector_store %arg5[%c0_15, %c0_16, %c0_17], %20 {strides = array<i32>} : memref<1x8x32xf32, #tpu.memory_space<vmem>>, vector<1x8x32xf32>,
    } else {
    }
    %c0 = arith.constant 0 : index
    %c0_1 = arith.constant 0 : index
    %3 = vector.load %arg2[%c0, %c0_1] : memref<32x32xf32, #tpu.memory_space<vmem>>, vector<32x32xf32>
    %c0_2 = arith.constant 0 : index
    %c0_3 = arith.constant 0 : index
    %4 = vector.load %arg3[%c0_2, %c0_3] : memref<32x32xf32, #tpu.memory_space<vmem>>, vector<32x32xf32>
    %c0_4 = arith.constant 0 : index
    %c0_5 = arith.constant 0 : index
    %5 = vector.load %arg4[%c0_4, %c0_5] : memref<32x1xf32, #tpu.memory_space<vmem>>, vector<32x1xf32>
    %cst = arith.constant 0.000000e+00 : f32
    %6 = vector.broadcast %cst : f32 to vector<32x1xf32>
    %7 = arith.cmpf ogt, %5, %6 : vector<32x1xf32>
    %8 = arith.subf %4, %3 : vector<32x32xf32>
    %cst_6 = arith.constant 0.000000e+00 : f32
    %9 = vector.shape_cast %7 : vector<32x1xi1> to vector<32x1xi1>
    %10 = vector.broadcast %9 : vector<32x1xi1> to vector<32x32xi1>
    %11 = vector.broadcast %cst_6 : f32 to vector<32x32xf32>
    %12 = arith.select %10, %8, %11 : vector<32x32xi1>, vector<32x32xf32>
    %13 = arith.mulf %12, %12 : vector<32x32xf32>
    %14 = vector.shape_cast %13 : vector<32x32xf32> to vector<4x8x32xf32>
    %cst_7 = arith.constant dense<0.000000e+00> : vector<8x32xf32>
    %15 = vector.multi_reduction <add>, %14, %cst_7 [0] : vector<4x8x32xf32> to vector<8x32xf32>
    %c0_8 = arith.constant 0 : index
    %c0_9 = arith.constant 0 : index
    %c0_10 = arith.constant 0 : index
    %16 = vector.load %arg5[%c0_8, %c0_9, %c0_10] : memref<1x8x32xf32, #tpu.memory_space<vmem>>, vector<1x8x32xf32>
    %17 = vector.shape_cast %15 : vector<8x32xf32> to vector<1x8x32xf32>
    %18 = arith.addf %16, %17 : vector<1x8x32xf32>
    %c0_11 = arith.constant 0 : index
    %c0_12 = arith.constant 0 : index
    %c0_13 = arith.constant 0 : index
    %19 = vector.load %arg5[%c0_11, %c0_12, %c0_13] : memref<1x8x32xf32, #tpu.memory_space<vmem>>, vector<1x8x32xf32>
    tpu.vector_store %arg5[%c0_11, %c0_12, %c0_13], %18 {strides = array<i32>} : memref<1x8x32xf32, #tpu.memory_space<vmem>>, vector<1x8x32xf32>,
    return
  }
  func.func @transform_0(%arg0: i32, %arg1: i32) -> (i32, i32) {
    %c1_i32 = arith.constant 1 : i32
    %0 = arith.muli %arg0, %c1_i32 : i32
    %1 = arith.addi %0, %arg1 : i32
    %c0_i32 = arith.constant 0 : i32
    %2 = arith.minsi %1, %c0_i32 : i32
    %c0_i32_0 = arith.constant 0 : i32
    %c0_i32_1 = arith.constant 0 : i32
    return %2, %c0_i32_0 : i32, i32
  }
  func.func @transform_1(%arg0: i32, %arg1: i32) -> (i32, i32) {
    %c1_i32 = arith.constant 1 : i32
    %0 = arith.muli %arg0, %c1_i32 : i32
    %1 = arith.addi %0, %arg1 : i32
    %c0_i32 = arith.constant 0 : i32
    %2 = arith.minsi %1, %c0_i32 : i32
    %c0_i32_0 = arith.constant 0 : i32
    %c0_i32_1 = arith.constant 0 : i32
    return %2, %c0_i32_0 : i32, i32
  }
  func.func @transform_2(%arg0: i32, %arg1: i32) -> (i32, i32) {
    %c1_i32 = arith.constant 1 : i32
    %0 = arith.muli %arg0, %c1_i32 : i32
    %1 = arith.addi %0, %arg1 : i32
    %c0_i32 = arith.constant 0 : i32
    %c0_i32_0 = arith.constant 0 : i32
    return %1, %c0_i32 : i32, i32
  }
  func.func @transform_3(%arg0: i32, %arg1: i32) -> (i32, i32, i32) {
    %c0_i32 = arith.constant 0 : i32
    %c0_i32_0 = arith.constant 0 : i32
    %c0_i32_1 = arith.constant 0 : i32
    return %arg0, %c0_i32, %c0_i32_0 : i32, i32, i32
  }
}

</mosaic_0001>

<llo_original>
// kernel: masked_node_mse.1
$region0: #{masked_node_mse.1}
  #allocation0 [shape = 'u32[]', space=smem, size = 0x4, offset = 0x4, fixed_abs, tag = 'smem constant byte address 0x4 - core index']
  #allocation1 [shape = 'u32[144,128]{1,0:T(1,128)}', space=vmem, size = 0x12000, scoped, tag = 'internal scratch']
  %s0 = inlined_call_operand.vmem [shape: f32[32,32], index: 0, kind: input, shape index: {}]
  %s1 = inlined_call_operand.hbm [shape: f32[32,32], index: 1, kind: input, shape index: {}]
  %s2 = inlined_call_operand.vmem [shape: f32[32,1], index: 2, kind: input, shape index: {}]
  %s3 = inlined_call_operand.vmem [shape: f32[1,8,32], index: 3, kind: output, shape index: {}]
  %s4 = sld [smem:[#allocation0]]
  $region30: #{masked_node_mse.1} parent=0
    _
  %s6 = ssub.s32 1, %s4
  %s7 = scalar_select 0, %s6, %s4
  $region1: #{masked_node_mse.1} parent=0
    #allocation2 [shape = 'u8[16384]{0}', space=vmem, size = 0x4000, scoped, tag = 'input window, operand 1, single buffered']
    #allocation3 [shape = 's32[1]{0}', space=sflag, size = 0x4, scoped, tag = 'scoped memory for masked_node_mse.1']
    %8 = vsyncpa [#allocation3], 0
    // Predicated region
    $region2: #{masked_node_mse.1} parent=1 // pred_check
      _
    $region3: #{masked_node_mse.1} parent=1 // pred_check_branch
      %10 = sbr.rel (0) target = $region5
    $region4: #{masked_node_mse.1} parent=1 // pred_region
      %s11 = sadd.s32 0, 0
      %p12 = scmp.lt.s32.totalorder %s11, 0
      %s13 = scalar_select %p12, %s11, 0
      %s14 = smul.u32 4, %s13
      %p15 = scmp.lt.s32.totalorder %s14, 3
      %s16 = scalar_select %p15, %s14, 3
      %s17 = smul.addr %s16, 8
      %s18 = scalar_lea.vmem %s0, %s17
      %s19 = sadd.s32 0, 0
      %p20 = scmp.lt.s32.totalorder %s19, 0
      %s21 = scalar_select %p20, %s19, 0
      %s22 = smul.u32 4, %s21
    $region5: #{masked_node_mse.1} parent=1 // pred_fallthru
      _
    // Predicated region
    $region6: #{masked_node_mse.1} parent=1 // pred_check
      _
    $region7: #{masked_node_mse.1} parent=1 // pred_check_branch
      %24 = sbr.rel (0) target = $region9
    $region8: #{masked_node_mse.1} parent=1 // pred_region
      %s25 = sadd.s32 0, 0
      %p26 = scmp.lt.s32.totalorder %s25, 0
      %s27 = scalar_select %p26, %s25, 0
      %s28 = smul.u32 4, %s27
      %s30 = ssub.s32 512, 512
      %31 = vsyncadd [#allocation3], %s30
      %s32 = smul.addr %s28, 128
      %s33 = scalar_lea.hbm %s1, %s32
      %s34 = sshll.u32 [#allocation2], 4
      %s35 = int_to_ptr.vmem [resolvable:$true] %s34
      %40 = dma.hbm_to_vmem [thread:$0]  %s33, 512, %s35, [#allocation3], 128, 128, 8
    $region9: #{masked_node_mse.1} parent=1 // pred_fallthru
      _
    // Predicated region
    $region10: #{masked_node_mse.1} parent=1 // pred_check
      _
    $region11: #{masked_node_mse.1} parent=1 // pred_check_branch
      %42 = sbr.rel (0) target = $region13
    $region12: #{masked_node_mse.1} parent=1 // pred_region
      %s43 = sadd.s32 0, 0
      %s44 = smul.u32 4, %s43
      %p45 = scmp.lt.s32.totalorder %s44, 3
      %s46 = scalar_select %p45, %s44, 3
      %s47 = smul.addr %s46, 8
      %s48 = scalar_lea.vmem %s2, %s47
      %s49 = sadd.s32 0, 0
      %s50 = smul.u32 4, %s49
    $region13: #{masked_node_mse.1} parent=1 // pred_fallthru
      _
    // Predicated region
    $region14: #{masked_node_mse.1} parent=1 // pred_check
      _
    $region15: #{masked_node_mse.1} parent=1 // pred_check_branch
      %52 = sbr.rel (0) target = $region17
    $region16: #{masked_node_mse.1} parent=1 // pred_region
      %53 = dma.done [#allocation3], 512
    $region17: #{masked_node_mse.1} parent=1 // pred_fallthru
      _
    %s54 = sadd.s32 0, 0
    %p55 = scmp.lt.s32.totalorder %s54, 0
    %s56 = scalar_select %p55, %s54, 0
    %s57 = smul.u32 4, %s56
    %p58 = scmp.lt.s32.totalorder %s57, 3
    %s59 = scalar_select %p58, %s57, 3
    %s60 = smul.addr %s59, 8
    %s61 = scalar_lea.vmem %s0, %s60
    %s62 = sadd.s32 0, 0
    %s63 = smul.u32 4, %s62
    %p64 = scmp.lt.s32.totalorder %s63, 3
    %s65 = scalar_select %p64, %s63, 3
    %s66 = smul.addr %s65, 8
    %s67 = scalar_lea.vmem %s2, %s66
    %s68 = sadd.s32 0, 0
    %p69 = scmp.lt.s32.totalorder %s68, 0
    %s70 = scalar_select %p69, %s68, 0
    %s71 = smul.u32 4, %s70
    %p72 = scmp.lt.s32.totalorder %s71, 3
    %s73 = scalar_select %p72, %s71, 3
    %s74 = smul.addr %s73, 8
    %s75 = scalar_lea.vmem %s0, %s74
    %s76 = sadd.s32 0, 0
    %p77 = scmp.lt.s32.totalorder %s76, 0
    %s78 = scalar_select %p77, %s76, 0
    %s79 = smul.u32 4, %s78
    %s80 = sadd.s32 0, 0
    %p81 = scmp.lt.s32.totalorder %s80, 0
    %s82 = scalar_select %p81, %s80, 0
    %s83 = smul.u32 4, %s82
    %s84 = sadd.s32 0, 0
    %s85 = smul.u32 4, %s84
    %p86 = scmp.lt.s32.totalorder %s85, 3
    %s87 = scalar_select %p86, %s85, 3
    %s88 = smul.addr %s87, 8
    %s89 = scalar_lea.vmem %s2, %s88
    %s90 = sadd.s32 0, 0
    %s91 = smul.u32 4, %s90
    %p92 = scmp.eq.s32.totalorder 0, 0
    // Predicated region
    $region18: #{masked_node_mse.1} parent=1 // pred_check
      %p93 = pneg %p92
    $region19: #{masked_node_mse.1} parent=1 // pred_check_branch
      %95 = sbr.rel (%p93) target = $region21
    $region20: #{masked_node_mse.1} parent=1 // pred_region
      %vm96 = vcmask 261120
      %97 = vst.msk [vmem:[%s3] sm:$0xff] %vm96, 0.0
    $region21: #{masked_node_mse.1} parent=1 // pred_fallthru
      _
    %v98 = vld [vmem:[%s75] sm:$0xff]
    %v99 = vld [vmem:[%s75 + $0x8] sm:$0xff]
    %v100 = vld [vmem:[%s75 + $0x10] sm:$0xff]
    %v101 = vld [vmem:[%s75 + $0x18] sm:$0xff]
    %v102 = vld [vmem:[#allocation2] sm:$0xff]
    %v103 = vld [vmem:[#allocation2 + $0x8] sm:$0xff]
    %v104 = vld [vmem:[#allocation2 + $0x10] sm:$0xff]
    %v105 = vld [vmem:[#allocation2 + $0x18] sm:$0xff]
    %v106 = vld [vmem:[%s89] sm:$0xff]
    %v107 = vld [vmem:[%s89 + $0x8] sm:$0xff]
    %v108 = vld [vmem:[%s89 + $0x10] sm:$0xff]
    %v109 = vld [vmem:[%s89 + $0x18] sm:$0xff]
    %vm110 = vcmp.gt.f32.partialorder %v106, 0.0
    %vm111 = vcmp.gt.f32.partialorder %v107, 0.0
    %vm112 = vcmp.gt.f32.partialorder %v108, 0.0
    %vm113 = vcmp.gt.f32.partialorder %v109, 0.0
    %v114 = vsub.f32 %v102, %v98
    %v115 = vsub.f32 %v103, %v99
    %v116 = vsub.f32 %v104, %v100
    %v117 = vsub.f32 %v105, %v101
    %v118 = vsel %vm110, 1, 0
    %v119 = vsel %vm111, 1, 0
    %v120 = vsel %vm112, 1, 0
    %v121 = vsel %vm113, 1, 0
    %122 = vset.pattern.permute.xlu0 0
    %123 = vperm.xlu0 %122, %v118
    %v124 = vpop.permute.xlu0 %123
    %125 = vset.pattern.permute.xlu0 0
    %126 = vperm.xlu0 %125, %v119
    %v127 = vpop.permute.xlu0 %126
    %128 = vset.pattern.permute.xlu0 0
    %129 = vperm.xlu0 %128, %v120
    %v130 = vpop.permute.xlu0 %129
    %131 = vset.pattern.permute.xlu0 0
    %132 = vperm.xlu0 %131, %v121
    %v133 = vpop.permute.xlu0 %132
    %vm134 = vcmp.eq.s32.totalorder %v124, 1
    %vm135 = vcmp.eq.s32.totalorder %v127, 1
    %vm136 = vcmp.eq.s32.totalorder %v130, 1
    %vm137 = vcmp.eq.s32.totalorder %v133, 1
    %v138 = vsel %vm134, %v114, 0.0
    %v139 = vsel %vm135, %v115, 0.0
    %v140 = vsel %vm136, %v116, 0.0
    %v141 = vsel %vm137, %v117, 0.0
    %v142 = vmul.f32 %v138, %v138
    %v143 = vmul.f32 %v139, %v139
    %v144 = vmul.f32 %v140, %v140
    %v145 = vmul.f32 %v141, %v141
    %vm146 = vcmask 261120
    %v147 = vsel %vm146, %v142, 0.0
    %v148 = vsel %vm146, %v143, 0.0
    %v149 = vadd.f32 %v147, %v148
    %v150 = vsel %vm146, %v144, 0.0
    %v151 = vadd.f32 %v149, %v150
    %v152 = vsel %vm146, %v145, 0.0
    %v153 = vadd.f32 %v151, %v152
    %v154 = vld [vmem:[%s3] sm:$0xff]
    %v155 = vadd.f32 %v154, %v153
    %156 = vst.msk [vmem:[%s3] sm:$0xff] %vm146, %v155
    // Predicated region
    $region22: #{masked_node_mse.1} parent=1 // pred_check
      _
    $region23: #{masked_node_mse.1} parent=1 // pred_check_branch
      %158 = sbr.rel (0) target = $region25
    $region24: #{masked_node_mse.1} parent=1 // pred_region
      _
    $region25: #{masked_node_mse.1} parent=1 // pred_fallthru
      _
    // Predicated region
    $region26: #{masked_node_mse.1} parent=1 // pred_check
      _
    $region27: #{masked_node_mse.1} parent=1 // pred_check_branch
      %160 = sbr.rel (0) target = $region29
    $region28: #{masked_node_mse.1} parent=1 // pred_region
      _
    $region29: #{masked_node_mse.1} parent=1 // pred_fallthru
      _
    %161 = vsyncpa [#allocation3], 1

</llo_original>
